<compile_context>
chip_gen: v7x
topology: tpu7x:2x2x1
jax: 0.10.0
libtpu: 0.0.40
codegen_flags: <defaults>
</compile_context>

<pallas_src>
import functools
import math

import numpy as np
import jax
import jax.numpy as jnp
from jax.experimental import pallas as pl
from jax.experimental.pallas import tpu as pltpu


# ------------------------------- Pallas kernel -------------------------------
def _gumbel_sinkhorn_entropy_kernel(inv_tau_ref, n_iters_ref, logw_ref, noise_ref,
                                    perm_ref, reg_ref, *, noise_factor, inv_n_perms, eps):
    """Single invocation (no grid): all P permutation candidates at once.

    inv_tau_ref : SMEM (1,)      f32  1/temperature (runtime scalar)
    n_iters_ref : SMEM (1,)      i32  Sinkhorn iteration count (runtime scalar)
    logw_ref    : VMEM (P, N, N) f32  learned log-weights
    noise_ref   : VMEM (P, N, N) f32  pre-sampled standard Gumbel noise
    perm_ref    : VMEM (P, N, N) f32  output soft permutations
    reg_ref     : SMEM (1,)      f32  entropy regularization (mean over P)
    """
    inv_tau = inv_tau_ref[0]
    n_iters = n_iters_ref[0]

    # Gumbel-noised, temperature-scaled log-alpha for all P candidates at once.
    la = logw_ref[...]
    if noise_factor != 0.0:            # static Python branch (matches torch noise_factor==0.0 path)
        la = la + noise_ref[...] * noise_factor
    la = la * inv_tau                  # reciprocal-multiply instead of per-element divide

    def _normalize(x, axis):
        # x - logsumexp(x, axis) == (x - m) - log(sum(exp(x - m)))
        xm = x - jnp.max(x, axis=axis, keepdims=True)
        return xm - jnp.log(jnp.sum(jnp.exp(xm), axis=axis, keepdims=True))

    def body(_, x):
        x = _normalize(x, 2)   # torch dim=2: row normalization
        x = _normalize(x, 1)   # torch dim=1: column normalization
        return x

    # Dynamic trip count (SMEM scalar) -> no recompiles as the schedule ramps
    # 20 -> 150.  Iterations are serially dependent, so the loop stays a visible
    # (non-unrolled) loop; the P chains inside the 3-D block provide the ILP
    # that hides the per-op XLU/EUP FIFO latency.
    la = jax.lax.fori_loop(0, n_iters, body, la)
    p = jnp.exp(la)
    perm_ref[...] = p

    # Entropy regularization, mean over the P candidates (single fused reduction).
    row_inv = pl.reciprocal(jnp.sum(p, axis=2, keepdims=True), approx=False)  # (P, N, 1)
    row_norm = p * row_inv
    ent_terms = (-p) * jnp.log(p + eps) + (-row_norm) * jnp.log(row_norm + eps)
    reg_ref[0] = jnp.sum(ent_terms) * inv_n_perms


def gumbel_sinkhorn_pallas(log_weights, gumbel_noise, inv_tau, n_iters, *, noise_factor):
    """Fused Gumbel-Sinkhorn + entropy-regularization kernel (single invocation).

    `inv_tau` is a (1,) f32 array and `n_iters` a (1,) i32 array so the whole
    call is schedule-invariant (no recompiles across training).
    """
    P, N, _ = log_weights.shape

    kernel = functools.partial(
        _gumbel_sinkhorn_entropy_kernel,
        noise_factor=float(noise_factor),
        inv_n_perms=1.0 / float(P),
        eps=1e-6,
    )

    perm, reg = pl.pallas_call(
        kernel,
        in_specs=[
            pl.BlockSpec(memory_space=pltpu.SMEM),   # 1/tau   (1,)
            pl.BlockSpec(memory_space=pltpu.SMEM),   # n_iters (1,)
            pl.BlockSpec(memory_space=pltpu.VMEM),   # log weights   (P, N, N)
            pl.BlockSpec(memory_space=pltpu.VMEM),   # gumbel noise  (P, N, N)
        ],
        out_specs=(
            pl.BlockSpec(memory_space=pltpu.VMEM),   # soft permutations (P, N, N)
            pl.BlockSpec(memory_space=pltpu.SMEM),   # entropy reg scalar (1,)
        ),
        out_shape=(
            jax.ShapeDtypeStruct((P, N, N), jnp.float32),
            jax.ShapeDtypeStruct((1,), jnp.float32),
        ),
    )(inv_tau, n_iters, log_weights, gumbel_noise)
    return perm, reg[0]


# ----------------------------- host-side helpers ------------------------------
def _sample_gumbel(key, shape, eps=1e-20):
    u = jax.random.uniform(key, shape, dtype=jnp.float32)
    return -jnp.log(-jnp.log(u + eps) + eps)


def _fused_training_forward(log_weights, key, inv_tau, n_iters, *, noise_factor):
    """Gumbel sampling + Pallas Sinkhorn in one jitted graph (no retracing)."""
    noise = _sample_gumbel(key, log_weights.shape)
    return gumbel_sinkhorn_pallas(log_weights, noise, inv_tau, n_iters,
                                  noise_factor=noise_factor)


class LearnPermutationsPallas:
    """JAX/Pallas port of LearnPermutationsBase (training forward path)."""

    def __init__(self, config, key):
        self.nb_experts = config["nb_experts"]
        self.k = config["k"]
        self.tau_initial = 0.001
        self.tau_final = 1e-7
        self.steps_per_epoch = config["steps_per_epoch"]
        self.epochs_for_learning_permutation = config["epochs_for_learning_permutation"]
        self.iterations_for_learning_permutation = (
            self.steps_per_epoch * self.epochs_for_learning_permutation
        )
        self.learn_k_permutations = config["learn_k_permutations"]
        self.no_of_permutations = self.k if self.learn_k_permutations else 1
        self.noise_factor = config["noise_factor"]
        self.perm_entropy_reg = config["perm_entropy_reg"]
        self.iterations = 0  # int32 buffer in the torch module

        # Deterministic parameter init: uniform(-0.05, 0.05), shape (P, N, N).
        self.permutation_log_weights = jax.random.uniform(
            key,
            (self.no_of_permutations, self.nb_experts, self.nb_experts),
            dtype=jnp.float32,
            minval=-0.05,
            maxval=0.05,
        )
        self.permutation_weights = jnp.zeros(
            (self.no_of_permutations, self.nb_experts, self.nb_experts), jnp.float32
        )

        # One compiled graph for the whole training forward (sampling + kernel);
        # tau / n_iters are runtime arrays, so the schedule never retraces.
        self._fused_forward = jax.jit(
            functools.partial(_fused_training_forward, noise_factor=float(self.noise_factor))
        )

    def _schedule(self):
        """tau / n_iters schedule (matches the torch arithmetic)."""
        it = self.iterations
        denom = self.iterations_for_learning_permutation
        log_tau = math.log10(self.tau_initial) + (
            math.log10(self.tau_final) - math.log10(self.tau_initial)
        ) * it / denom
        tau = 10.0 ** log_tau
        n_iters = int(np.clip(20.0 + (150.0 - 20.0) * it / denom, 20.0, 150.0))
        return tau, n_iters

    def forward(self, inputs, key, training=True):
        # `inputs` is ignored by the reference forward (only used for device placement).
        del inputs
        self.iterations += 1 if training else 0

        if not training:
            # TODO(synk): inference branch uses scipy.optimize.linear_sum_assignment
            # (Hungarian algorithm) to extract hard permutation masks; no clean
            # Pallas equivalent, so only the training branch is implemented here.
            raise NotImplementedError("inference (Hungarian) branch not implemented")
        if self.iterations >= self.iterations_for_learning_permutation:
            # TODO(synk): after the learning phase the torch module switches to the
            # Hungarian hard-mask path (and detaches the log-weights); not implemented.
            raise NotImplementedError("post-learning (Hungarian) branch not implemented")

        tau, n_iters = self._schedule()
        inv_tau_arr = jnp.full((1,), 1.0 / tau, jnp.float32)
        n_iters_arr = jnp.full((1,), n_iters, jnp.int32)

        perm, reg = self._fused_forward(
            self.permutation_log_weights, key, inv_tau_arr, n_iters_arr
        )
        self.permutation_weights = perm  # non-trainable buffer update, like the torch module

        if not self.learn_k_permutations:
            perm = jnp.tile(perm, (self.k, 1, 1))

        return perm, self.perm_entropy_reg * reg


# ----------------------------- pure-JAX reference -----------------------------
def _reference(log_weights, noise, tau, noise_factor, n_iters, eps=1e-6):
    la = (log_weights + noise * noise_factor) / tau
    for _ in range(n_iters):
        la = la - jax.scipy.special.logsumexp(la, axis=2, keepdims=True)
        la = la - jax.scipy.special.logsumexp(la, axis=1, keepdims=True)
    p = jnp.exp(la)
    row_norm = p / jnp.sum(p, axis=-1, keepdims=True)
    reg = jnp.mean(jnp.sum(-p * jnp.log(p + eps), axis=(1, 2))) + jnp.mean(
        jnp.sum(-row_norm * jnp.log(row_norm + eps), axis=(1, 2))
    )
    return p, reg


if __name__ == "__main__":
    config = dict(
        nb_experts=8,
        k=4,
        steps_per_epoch=100,
        epochs_for_learning_permutation=10,
        learn_k_permutations=True,
        noise_factor=1e-4,
        perm_entropy_reg=1e-2,
    )

    key = jax.random.PRNGKey(0)
    k_param, k_noise, k_noise2, k_inp = jax.random.split(key, 4)

    module = LearnPermutationsPallas(config, k_param)
    inputs = jax.random.normal(k_inp, (2, 32), dtype=jnp.float32)  # ignored by forward

    perm, reg = module.forward(inputs, k_noise, training=True)
    perm = jax.block_until_ready(perm)
    reg = jax.block_until_ready(reg)

    # Correctness check against a pure-JAX reference of the same math (same noise:
    # jax.random is deterministic for a given key/shape/dtype, in or out of jit).
    tau, n_iters = module._schedule()  # iterations == 1 here, same values used in the call
    noise = _sample_gumbel(k_noise, module.permutation_log_weights.shape)
    perm_ref, reg_ref = _reference(
        module.permutation_log_weights, noise, tau, config["noise_factor"], n_iters
    )

    np.testing.assert_allclose(np.asarray(perm), np.asarray(perm_ref), rtol=2e-3, atol=2e-3)
    np.testing.assert_allclose(
        float(reg), float(config["perm_entropy_reg"] * reg_ref), rtol=2e-3, atol=2e-3
    )
    assert perm.shape == (config["k"], config["nb_experts"], config["nb_experts"])

    # Second step with a different key: exercises the runtime tau / n_iters path
    # (no recompilation, dynamic fori_loop bound, single jitted graph reuse).
    perm2, reg2 = module.forward(inputs, k_noise2, training=True)
    jax.block_until_ready(perm2)
    jax.block_until_ready(reg2)
    assert perm2.shape == perm.shape

    print("KERNEL_OK")
</pallas_src>

<mosaic_0001>
module attributes {stable_mosaic.version = 11 : i64} {
  func.func @_gumbel_sinkhorn_entropy_kernel(%arg0: memref<1xf32, #tpu.memory_space<smem>>, %arg1: memref<1xi32, #tpu.memory_space<smem>>, %arg2: memref<4x8x8xf32, #tpu.memory_space<vmem>>, %arg3: memref<4x8x8xf32, #tpu.memory_space<vmem>>, %arg4: memref<4x8x8xf32, #tpu.memory_space<vmem>>, %arg5: memref<1xf32, #tpu.memory_space<smem>>) attributes {dimension_semantics = [], scalar_prefetch = 0 : i64, scratch_operands = 0 : i64, tpu.core_type = #tpu.core_type<tc>} {
    %c0 = arith.constant 0 : index
    %0 = memref.load %arg0[%c0] : memref<1xf32, #tpu.memory_space<smem>>
    %c0_0 = arith.constant 0 : index
    %1 = memref.load %arg1[%c0_0] : memref<1xi32, #tpu.memory_space<smem>>
    %c0_1 = arith.constant 0 : index
    %c0_2 = arith.constant 0 : index
    %c0_3 = arith.constant 0 : index
    %2 = vector.load %arg2[%c0_1, %c0_2, %c0_3] : memref<4x8x8xf32, #tpu.memory_space<vmem>>, vector<4x8x8xf32>
    %c0_4 = arith.constant 0 : index
    %c0_5 = arith.constant 0 : index
    %c0_6 = arith.constant 0 : index
    %3 = vector.load %arg3[%c0_4, %c0_5, %c0_6] : memref<4x8x8xf32, #tpu.memory_space<vmem>>, vector<4x8x8xf32>
    %cst = arith.constant 9.99999974E-5 : f32
    %4 = vector.broadcast %cst : f32 to vector<4x8x8xf32>
    %5 = arith.mulf %3, %4 : vector<4x8x8xf32>
    %6 = arith.addf %2, %5 : vector<4x8x8xf32>
    %7 = vector.broadcast %0 : f32 to vector<4x8x8xf32>
    %8 = arith.mulf %6, %7 : vector<4x8x8xf32>
    %c0_i32 = arith.constant 0 : i32
    %9 = arith.subi %1, %c0_i32 : i32
    %10 = arith.addi %c0_i32, %9 : i32
    %c1_i32 = arith.constant 1 : i32
    %11 = scf.for %arg6 = %c0_i32 to %10 step %c1_i32 iter_args(%arg7 = %8) -> (vector<4x8x8xf32>)  : i32 {
      %cst_18 = arith.constant dense<0xFF800000> : vector<4x8xf32>
      %38 = vector.multi_reduction <maximumf>, %arg7, %cst_18 [2] : vector<4x8x8xf32> to vector<4x8xf32>
      %39 = vector.shape_cast %38 : vector<4x8xf32> to vector<4x8x1xf32>
      %40 = vector.broadcast %39 : vector<4x8x1xf32> to vector<4x8x8xf32>
      %41 = arith.subf %arg7, %40 : vector<4x8x8xf32>
      %42 = math.exp %41 : vector<4x8x8xf32>
      %cst_19 = arith.constant dense<0.000000e+00> : vector<4x8xf32>
      %43 = vector.multi_reduction <add>, %42, %cst_19 [2] : vector<4x8x8xf32> to vector<4x8xf32>
      %44 = vector.shape_cast %43 : vector<4x8xf32> to vector<4x8x1xf32>
      %45 = math.log %44 : vector<4x8x1xf32>
      %46 = vector.broadcast %45 : vector<4x8x1xf32> to vector<4x8x8xf32>
      %47 = arith.subf %41, %46 : vector<4x8x8xf32>
      %cst_20 = arith.constant dense<0xFF800000> : vector<4x8xf32>
      %48 = vector.multi_reduction <maximumf>, %47, %cst_20 [1] : vector<4x8x8xf32> to vector<4x8xf32>
      %49 = vector.shape_cast %48 : vector<4x8xf32> to vector<4x1x8xf32>
      %50 = vector.broadcast %49 : vector<4x1x8xf32> to vector<4x8x8xf32>
      %51 = arith.subf %47, %50 : vector<4x8x8xf32>
      %52 = math.exp %51 : vector<4x8x8xf32>
      %cst_21 = arith.constant dense<0.000000e+00> : vector<4x8xf32>
      %53 = vector.multi_reduction <add>, %52, %cst_21 [1] : vector<4x8x8xf32> to vector<4x8xf32>
      %54 = vector.shape_cast %53 : vector<4x8xf32> to vector<4x1x8xf32>
      %55 = math.log %54 : vector<4x1x8xf32>
      %56 = vector.broadcast %55 : vector<4x1x8xf32> to vector<4x8x8xf32>
      %57 = arith.subf %51, %56 : vector<4x8x8xf32>
      scf.yield %57 : vector<4x8x8xf32>
    }
    %12 = math.exp %11 : vector<4x8x8xf32>
    %c0_7 = arith.constant 0 : index
    %c0_8 = arith.constant 0 : index
    %c0_9 = arith.constant 0 : index
    %13 = vector.load %arg4[%c0_7, %c0_8, %c0_9] : memref<4x8x8xf32, #tpu.memory_space<vmem>>, vector<4x8x8xf32>
    tpu.vector_store %arg4[%c0_7, %c0_8, %c0_9], %12 {strides = array<i32>} : memref<4x8x8xf32, #tpu.memory_space<vmem>>, vector<4x8x8xf32>,
    %cst_10 = arith.constant dense<0.000000e+00> : vector<4x8xf32>
    %14 = vector.multi_reduction <add>, %12, %cst_10 [2] : vector<4x8x8xf32> to vector<4x8xf32>
    %15 = vector.shape_cast %14 : vector<4x8xf32> to vector<4x8x1xf32>
    %16 = tpu.reciprocal %15 : vector<4x8x1xf32> -> vector<4x8x1xf32>
    %17 = vector.broadcast %16 : vector<4x8x1xf32> to vector<4x8x8xf32>
    %18 = arith.mulf %12, %17 : vector<4x8x8xf32>
    %cst_11 = arith.constant 0.000000e+00 : f32
    %19 = vector.broadcast %cst_11 : f32 to vector<4x8x8xf32>
    %20 = arith.subf %19, %12 : vector<4x8x8xf32>
    %cst_12 = arith.constant 9.99999997E-7 : f32
    %21 = vector.broadcast %cst_12 : f32 to vector<4x8x8xf32>
    %22 = arith.addf %12, %21 : vector<4x8x8xf32>
    %23 = math.log %22 : vector<4x8x8xf32>
    %24 = arith.mulf %20, %23 : vector<4x8x8xf32>
    %cst_13 = arith.constant 0.000000e+00 : f32
    %25 = vector.broadcast %cst_13 : f32 to vector<4x8x8xf32>
    %26 = arith.subf %25, %18 : vector<4x8x8xf32>
    %cst_14 = arith.constant 9.99999997E-7 : f32
    %27 = vector.broadcast %cst_14 : f32 to vector<4x8x8xf32>
    %28 = arith.addf %18, %27 : vector<4x8x8xf32>
    %29 = math.log %28 : vector<4x8x8xf32>
    %30 = arith.mulf %26, %29 : vector<4x8x8xf32>
    %31 = arith.addf %24, %30 : vector<4x8x8xf32>
    %32 = vector.shape_cast %31 : vector<4x8x8xf32> to vector<1x4x8x8xf32>
    %cst_15 = arith.constant dense<0.000000e+00> : vector<1xf32>
    %33 = vector.multi_reduction <add>, %32, %cst_15 [1, 2, 3] : vector<1x4x8x8xf32> to vector<1xf32>
    %34 = vector.shape_cast %33 : vector<1xf32> to vector<1x1x1x1xf32>
    %35 = vector.extract %34[0, 0, 0, 0] : f32 from vector<1x1x1x1xf32>
    %cst_16 = arith.constant 2.500000e-01 : f32
    %36 = arith.mulf %35, %cst_16 : f32
    %c0_17 = arith.constant 0 : index
    %37 = memref.load %arg5[%c0_17] : memref<1xf32, #tpu.memory_space<smem>>
    memref.store %36, %arg5[%c0_17] : memref<1xf32, #tpu.memory_space<smem>>
    return
  }
}

</mosaic_0001>

<llo_original>
// kernel: _fused_training_forward.1
$region0: #{_fused_training_forward.1}
  #allocation0 [shape = 'u32[]', space=smem, size = 0x4, offset = 0x4, fixed_abs, tag = 'smem constant byte address 0x4 - core index']
  #allocation1 [shape = 'u32[144,128]{1,0:T(1,128)}', space=vmem, size = 0x12000, scoped, tag = 'internal scratch']
  #allocation2 [shape = 'f32[1]{0:T(128)S(6)}', space=smem, size = 0x200, scoped, tag = 'scoped memory for _fused_training_forward.1']
  #allocation3 [shape = 's32[1]{0:T(128)S(6)}', space=smem, size = 0x200, scoped, tag = 'scoped memory for _fused_training_forward.1']
  %s0 = inlined_call_operand.<no memory space> [shape: f32[1], index: 0, kind: input, shape index: {}]
  %s1 = inlined_call_operand.<no memory space> [shape: s32[1], index: 1, kind: input, shape index: {}]
  %s2 = inlined_call_operand.vmem [shape: f32[4,8,8], index: 2, kind: input, shape index: {}]
  %s3 = inlined_call_operand.vmem [shape: f32[4,8,8], index: 3, kind: input, shape index: {}]
  %s4 = inlined_call_operand.hbm [shape: f32[4,8,8], index: 4, kind: output, shape index: {0}]
  %s5 = inlined_call_operand.hbm [shape: f32[1], index: 5, kind: output, shape index: {1}]
  %6 = xla_tuple %s4, %s5
  %s7 = sld [smem:[#allocation0]]
  $region41: #{_fused_training_forward.1} parent=0
    _
  %s9 = ssub.s32 1, %s7
  %s10 = scalar_select 0, %s9, %s7
  %11 = sst [smem:[#allocation2]] %s0
  %12 = sst [smem:[#allocation3]] %s1
  $region1: #{_fused_training_forward.1} parent=0
    #allocation4 [shape = 'u8[16384]{0}', space=vmem, size = 0x4000, scoped, tag = 'output window, operand 0, single buffered']
    #allocation5 [shape = 's32[1]{0}', space=sflag, size = 0x4, scoped, tag = 'scoped memory for _fused_training_forward.1']
    #allocation6 [shape = 's32[1]{0}', space=sflag, size = 0x4, scoped, tag = 'scoped memory for _fused_training_forward.1']
    #allocation7 [shape = 'u8[512]{0}', space=smem, size = 0x200, scoped, tag = 'output window, operand 1, single buffered']
    %13 = vsyncpa [#allocation5], 0
    %14 = vsyncpa [#allocation6], 0
    // Predicated region
    $region2: #{_fused_training_forward.1} parent=1 // pred_check
      _
    $region3: #{_fused_training_forward.1} parent=1 // pred_check_branch
      %16 = sbr.rel (0) target = $region5
    $region4: #{_fused_training_forward.1} parent=1 // pred_region
      _
    $region5: #{_fused_training_forward.1} parent=1 // pred_fallthru
      _
    // Predicated region
    $region6: #{_fused_training_forward.1} parent=1 // pred_check
      _
    $region7: #{_fused_training_forward.1} parent=1 // pred_check_branch
      %18 = sbr.rel (0) target = $region9
    $region8: #{_fused_training_forward.1} parent=1 // pred_region
      _
    $region9: #{_fused_training_forward.1} parent=1 // pred_fallthru
      _
    // Predicated region
    $region10: #{_fused_training_forward.1} parent=1 // pred_check
      _
    $region11: #{_fused_training_forward.1} parent=1 // pred_check_branch
      %20 = sbr.rel (0) target = $region13
    $region12: #{_fused_training_forward.1} parent=1 // pred_region
      _
    $region13: #{_fused_training_forward.1} parent=1 // pred_fallthru
      _
    // Predicated region
    $region14: #{_fused_training_forward.1} parent=1 // pred_check
      _
    $region15: #{_fused_training_forward.1} parent=1 // pred_check_branch
      %22 = sbr.rel (0) target = $region17
    $region16: #{_fused_training_forward.1} parent=1 // pred_region
      _
    $region17: #{_fused_training_forward.1} parent=1 // pred_fallthru
      _
    %s23 = sld [smem:[#allocation2]]
    %s24 = sld [smem:[#allocation3]]
    %v25 = vld [vmem:[%s2] sm:$0xff]
    %v26 = vld [vmem:[%s2 + $0x8] sm:$0xff]
    %v27 = vld [vmem:[%s2 + $0x10] sm:$0xff]
    %v28 = vld [vmem:[%s2 + $0x18] sm:$0xff]
    %v29 = vld [vmem:[%s3] sm:$0xff]
    %v30 = vld [vmem:[%s3 + $0x8] sm:$0xff]
    %v31 = vld [vmem:[%s3 + $0x10] sm:$0xff]
    %v32 = vld [vmem:[%s3 + $0x18] sm:$0xff]
    %v33 = vmul.f32 %v29, 0.0001
    %v34 = vmul.f32 %v30, 0.0001
    %v35 = vmul.f32 %v31, 0.0001
    %v36 = vmul.f32 %v32, 0.0001
    %v37 = vadd.f32 %v25, %v33
    %v38 = vadd.f32 %v26, %v34
    %v39 = vadd.f32 %v27, %v35
    %v40 = vadd.f32 %v28, %v36
    %v41 = vstv %s23
    %v42 = vmul.f32 %v37, %v41
    %v43 = vmul.f32 %v38, %v41
    %v44 = vmul.f32 %v39, %v41
    %v45 = vmul.f32 %v40, %v41
    // While loop
    $region18: #{_fused_training_forward.1} parent=1 // loop_pre_header
      _
    $region19: #{_fused_training_forward.1} parent=1 // loop_header
      %s47 = sphi 0, %s49
      %p48 = scmp.ge.s32.totalorder %s47, %s24
      %v52 = vphi %v42, %v181
      %v53 = vphi %v43, %v182
      %v54 = vphi %v44, %v183
      %v55 = vphi %v45, %v184
    $region20: #{_fused_training_forward.1} parent=1 // loop_header_branch
      %51 = sbr.rel (%p48) target = $region24
    $region21: #{_fused_training_forward.1} parent=1 // loop_body
      %vm56 = vcmask 64512
      %v57 = vsel %vm56, %v52, -inf
      %58 = vmax.xlane.f32.xlu0 %v57
      %v59 = vpop.xlane.xlu0 %58
      %v60 = vsel %vm56, %v53, -inf
      %61 = vmax.xlane.f32.xlu0 %v60
      %v62 = vpop.xlane.xlu0 %61
      %v63 = vsel %vm56, %v54, -inf
      %64 = vmax.xlane.f32.xlu0 %v63
      %v65 = vpop.xlane.xlu0 %64
      %v66 = vsel %vm56, %v55, -inf
      %67 = vmax.xlane.f32.xlu0 %v66
      %v68 = vpop.xlane.xlu0 %67
      %v69 = vsub.f32 %v52, %v59
      %v70 = vsub.f32 %v53, %v62
      %v71 = vsub.f32 %v54, %v65
      %v72 = vsub.f32 %v55, %v68
      %v73 = vmul.f32 %v69, 1.442695
      %v74 = vpow.pop %v73
      %v75 = vmul.f32 %v70, 1.442695
      %v76 = vpow.pop %v75
      %v77 = vmul.f32 %v71, 1.442695
      %v78 = vpow.pop %v77
      %v79 = vmul.f32 %v72, 1.442695
      %v80 = vpow.pop %v79
      %v81 = vsel %vm56, %v74, 0.0
      %82 = vadd.xlane.f32.xlu0 %v81
      %v83 = vpop.xlane.xlu0 %82
      %v84 = vsel %vm56, %v76, 0.0
      %85 = vadd.xlane.f32.xlu0 %v84
      %v86 = vpop.xlane.xlu0 %85
      %v87 = vsel %vm56, %v78, 0.0
      %88 = vadd.xlane.f32.xlu0 %v87
      %v89 = vpop.xlane.xlu0 %88
      %v90 = vsel %vm56, %v80, 0.0
      %91 = vadd.xlane.f32.xlu0 %v90
      %v92 = vpop.xlane.xlu0 %91
      %v93 = vlog2.pop %v83
      %v94 = vmul.f32 %v93, 0.6931472
      %v95 = vlog2.pop %v86
      %v96 = vmul.f32 %v95, 0.6931472
      %v97 = vlog2.pop %v89
      %v98 = vmul.f32 %v97, 0.6931472
      %v99 = vlog2.pop %v92
      %v100 = vmul.f32 %v99, 0.6931472
      %v101 = vsub.f32 %v69, %v94
      %v102 = vsub.f32 %v70, %v96
      %v103 = vsub.f32 %v71, %v98
      %v104 = vsub.f32 %v72, %v100
      %v105 = vsel %vm56, %v101, -inf
      %v106 = vrot.slane %v105, 4
      %v107 = vmax.f32 %v105, %v106
      %v108 = vrot.slane %v107, 2
      %v109 = vmax.f32 %v107, %v108
      %v110 = vrot.slane %v109, 1
      %v111 = vmax.f32 %v109, %v110
      %v112 = vsel %vm56, %v102, -inf
      %v113 = vrot.slane %v112, 4
      %v114 = vmax.f32 %v112, %v113
      %v115 = vrot.slane %v114, 2
      %v116 = vmax.f32 %v114, %v115
      %v117 = vrot.slane %v116, 1
      %v118 = vmax.f32 %v116, %v117
      %v119 = vsel %vm56, %v103, -inf
      %v120 = vrot.slane %v119, 4
      %v121 = vmax.f32 %v119, %v120
      %v122 = vrot.slane %v121, 2
      %v123 = vmax.f32 %v121, %v122
      %v124 = vrot.slane %v123, 1
      %v125 = vmax.f32 %v123, %v124
      %v126 = vsel %vm56, %v104, -inf
      %v127 = vrot.slane %v126, 4
      %v128 = vmax.f32 %v126, %v127
      %v129 = vrot.slane %v128, 2
      %v130 = vmax.f32 %v128, %v129
      %v131 = vrot.slane %v130, 1
      %v132 = vmax.f32 %v130, %v131
      %v133 = vsub.f32 %v101, %v111
      %v134 = vsub.f32 %v102, %v118
      %v135 = vsub.f32 %v103, %v125
      %v136 = vsub.f32 %v104, %v132
      %v137 = vmul.f32 %v133, 1.442695
      %v138 = vpow.pop %v137
      %v139 = vmul.f32 %v134, 1.442695
      %v140 = vpow.pop %v139
      %v141 = vmul.f32 %v135, 1.442695
      %v142 = vpow.pop %v141
      %v143 = vmul.f32 %v136, 1.442695
      %v144 = vpow.pop %v143
      %v145 = vsel %vm56, %v138, 0.0
      %v146 = vrot.slane %v145, 4
      %v147 = vadd.f32 %v145, %v146
      %v148 = vrot.slane %v147, 2
      %v149 = vadd.f32 %v147, %v148
      %v150 = vrot.slane %v149, 1
      %v151 = vadd.f32 %v149, %v150
      %v152 = vsel %vm56, %v140, 0.0
      %v153 = vrot.slane %v152, 4
      %v154 = vadd.f32 %v152, %v153
      %v155 = vrot.slane %v154, 2
      %v156 = vadd.f32 %v154, %v155
      %v157 = vrot.slane %v156, 1
      %v158 = vadd.f32 %v156, %v157
      %v159 = vsel %vm56, %v142, 0.0
      %v160 = vrot.slane %v159, 4
      %v161 = vadd.f32 %v159, %v160
      %v162 = vrot.slane %v161, 2
      %v163 = vadd.f32 %v161, %v162
      %v164 = vrot.slane %v163, 1
      %v165 = vadd.f32 %v163, %v164
      %v166 = vsel %vm56, %v144, 0.0
      %v167 = vrot.slane %v166, 4
      %v168 = vadd.f32 %v166, %v167
      %v169 = vrot.slane %v168, 2
      %v170 = vadd.f32 %v168, %v169
      %v171 = vrot.slane %v170, 1
      %v172 = vadd.f32 %v170, %v171
      %v173 = vlog2.pop %v151
      %v174 = vmul.f32 %v173, 0.6931472
      %v175 = vlog2.pop %v158
      %v176 = vmul.f32 %v175, 0.6931472
      %v177 = vlog2.pop %v165
      %v178 = vmul.f32 %v177, 0.6931472
      %v179 = vlog2.pop %v172
      %v180 = vmul.f32 %v179, 0.6931472
      %v181 = vsub.f32 %v133, %v174
      %v182 = vsub.f32 %v134, %v176
      %v183 = vsub.f32 %v135, %v178
      %v184 = vsub.f32 %v136, %v180
    $region22: #{_fused_training_forward.1} parent=1 // loop_footer
      %s49 = sadd.s32 %s47, 1
    $region23: #{_fused_training_forward.1} parent=1 // loop_footer_branch
      %46 = sbr.rel target = $region19
    $region24: #{_fused_training_forward.1} parent=1 // loop_exit
      _
    %v185 = vmul.f32 %v52, 1.442695
    %v186 = vpow.pop %v185
    %v187 = vmul.f32 %v53, 1.442695
    %v188 = vpow.pop %v187
    %v189 = vmul.f32 %v54, 1.442695
    %v190 = vpow.pop %v189
    %v191 = vmul.f32 %v55, 1.442695
    %v192 = vpow.pop %v191
    %vm193 = vcmask 64512
    %194 = vst.msk [vmem:[#allocation4] sm:$0xff] %vm193, %v186
    %195 = vst.msk [vmem:[#allocation4 + $0x8] sm:$0xff] %vm193, %v188
    %196 = vst.msk [vmem:[#allocation4 + $0x10] sm:$0xff] %vm193, %v190
    %197 = vst.msk [vmem:[#allocation4 + $0x18] sm:$0xff] %vm193, %v192
    %v198 = vsel %vm193, %v186, 0.0
    %199 = vadd.xlane.f32.xlu0 %v198
    %v200 = vpop.xlane.xlu0 %199
    %v201 = vsel %vm193, %v188, 0.0
    %202 = vadd.xlane.f32.xlu0 %v201
    %v203 = vpop.xlane.xlu0 %202
    %v204 = vsel %vm193, %v190, 0.0
    %205 = vadd.xlane.f32.xlu0 %v204
    %v206 = vpop.xlane.xlu0 %205
    %v207 = vsel %vm193, %v192, 0.0
    %208 = vadd.xlane.f32.xlu0 %v207
    %v209 = vpop.xlane.xlu0 %208
    %v210 = vrcp.pop %v200
    %v211 = vrcp.pop %v203
    %v212 = vrcp.pop %v206
    %v213 = vrcp.pop %v209
    %v214 = vmul.f32 %v186, %v210
    %v215 = vmul.f32 %v188, %v211
    %v216 = vmul.f32 %v190, %v212
    %v217 = vmul.f32 %v192, %v213
    %v218 = vsub.f32 0.0, %v186
    %v219 = vsub.f32 0.0, %v188
    %v220 = vsub.f32 0.0, %v190
    %v221 = vsub.f32 0.0, %v192
    %v222 = vadd.f32 %v186, 1e-06
    %v223 = vadd.f32 %v188, 1e-06
    %v224 = vadd.f32 %v190, 1e-06
    %v225 = vadd.f32 %v192, 1e-06
    %v226 = vlog2.pop %v222
    %v227 = vmul.f32 %v226, 0.6931472
    %v228 = vlog2.pop %v223
    %v229 = vmul.f32 %v228, 0.6931472
    %v230 = vlog2.pop %v224
    %v231 = vmul.f32 %v230, 0.6931472
    %v232 = vlog2.pop %v225
    %v233 = vmul.f32 %v232, 0.6931472
    %v234 = vmul.f32 %v218, %v227
    %v235 = vmul.f32 %v219, %v229
    %v236 = vmul.f32 %v220, %v231
    %v237 = vmul.f32 %v221, %v233
    %v238 = vsub.f32 0.0, %v214
    %v239 = vsub.f32 0.0, %v215
    %v240 = vsub.f32 0.0, %v216
    %v241 = vsub.f32 0.0, %v217
    %v242 = vadd.f32 %v214, 1e-06
    %v243 = vadd.f32 %v215, 1e-06
    %v244 = vadd.f32 %v216, 1e-06
    %v245 = vadd.f32 %v217, 1e-06
    %v246 = vlog2.pop %v242
    %v247 = vmul.f32 %v246, 0.6931472
    %v248 = vlog2.pop %v243
    %v249 = vmul.f32 %v248, 0.6931472
    %v250 = vlog2.pop %v244
    %v251 = vmul.f32 %v250, 0.6931472
    %v252 = vlog2.pop %v245
    %v253 = vmul.f32 %v252, 0.6931472
    %v254 = vmul.f32 %v238, %v247
    %v255 = vmul.f32 %v239, %v249
    %v256 = vmul.f32 %v240, %v251
    %v257 = vmul.f32 %v241, %v253
    %v258 = vadd.f32 %v234, %v254
    %v259 = vadd.f32 %v235, %v255
    %v260 = vadd.f32 %v236, %v256
    %v261 = vadd.f32 %v237, %v257
    %v262 = vsel %vm193, %v258, 0.0
    %v263 = vsel %vm193, %v259, 0.0
    %v264 = vadd.f32 %v262, %v263
    %v265 = vsel %vm193, %v260, 0.0
    %v266 = vadd.f32 %v264, %v265
    %v267 = vsel %vm193, %v261, 0.0
    %v268 = vadd.f32 %v266, %v267
    %269 = vadd.xlane.f32.xlu0 %v268
    %v270 = vpop.xlane.xlu0 %269
    %v271 = vrot.slane %v270, 4
    %v272 = vadd.f32 %v270, %v271
    %v273 = vrot.slane %v272, 2
    %v274 = vadd.f32 %v272, %v273
    %v275 = vrot.slane %v274, 1
    %v276 = vadd.f32 %v274, %v275
    %s277 = vtos %v276
    %s278 = smul.f32 %s277, 0.25
    %s279 = scalar_lea.smem [#allocation7], 0
    %280 = sst [smem:[%s279]] %s278
    // Predicated region
    $region25: #{_fused_training_forward.1} parent=1 // pred_check
      _
    $region26: #{_fused_training_forward.1} parent=1 // pred_check_branch
      %282 = sbr.rel (0) target = $region28
    $region27: #{_fused_training_forward.1} parent=1 // pred_region
      %s284 = ssub.s32 512, 512
      %285 = vsyncadd [#allocation5], %s284
      %s286 = sshll.u32 [#allocation4], 4
      %s287 = int_to_ptr.vmem [resolvable:$true] %s286
      %292 = dma.vmem_to_hbm [thread:$0]  %s287, 512, %s4, [#allocation5], 128, 128, 8
    $region28: #{_fused_training_forward.1} parent=1 // pred_fallthru
      _
    // Predicated region
    $region29: #{_fused_training_forward.1} parent=1 // pred_check
      _
    $region30: #{_fused_training_forward.1} parent=1 // pred_check_branch
      %294 = sbr.rel (0) target = $region32
    $region31: #{_fused_training_forward.1} parent=1 // pred_region
      %s296 = ssub.s32 16, 16
      %297 = vsyncadd [#allocation6], %s296
      %300 = dma.smem_to_hbm [#allocation7], 16, %s5, [#allocation6]
    $region32: #{_fused_training_forward.1} parent=1 // pred_fallthru
      _
    // Predicated region
    $region33: #{_fused_training_forward.1} parent=1 // pred_check
      _
    $region34: #{_fused_training_forward.1} parent=1 // pred_check_branch
      %302 = sbr.rel (0) target = $region36
    $region35: #{_fused_training_forward.1} parent=1 // pred_region
      %303 = dma.done [#allocation5], 512
    $region36: #{_fused_training_forward.1} parent=1 // pred_fallthru
      _
    // Predicated region
    $region37: #{_fused_training_forward.1} parent=1 // pred_check
      _
    $region38: #{_fused_training_forward.1} parent=1 // pred_check_branch
      %305 = sbr.rel (0) target = $region40
    $region39: #{_fused_training_forward.1} parent=1 // pred_region
      %306 = dma.done [#allocation6], 16
    $region40: #{_fused_training_forward.1} parent=1 // pred_fallthru
      _
    %307 = sfence
    %308 = vsyncpa [#allocation5], 1
    %309 = vsyncpa [#allocation6], 1

</llo_original>
